<compile_context>
chip_gen: v7x
topology: tpu7x:2x2x1
jax: 0.10.0
libtpu: 0.0.40
codegen_flags: <defaults>
</compile_context>

<pallas_src>
import jax
import jax.numpy as jnp
from jax import lax
from jax.experimental import pallas as pl
from jax.experimental.pallas import tpu as pltpu


def _round_up(x, m):
    return ((x + m - 1) // m) * m


def _critic_kernel(s_ref, a_ref,
                   w1_ref, b1_ref, w2_ref, b2_ref, w3_ref, b3_ref,
                   w4_ref, b4_ref, w5_ref, b5_ref, w6_ref, b6_ref,
                   out_ref):
    f32 = jnp.float32
    bf16 = jnp.bfloat16

    s = s_ref[...].astype(bf16)                       # (tb, ns)
    a = a_ref[...].astype(bf16)                       # (tb, na)

    # state branch: fc1 -> tanh -> fc2 -> tanh
    x1 = jnp.tanh(jnp.dot(s, w1_ref[...], preferred_element_type=f32)
                  + b1_ref[...])                      # (tb, 16)
    x2 = jnp.tanh(jnp.dot(x1.astype(bf16), w2_ref[...],
                          preferred_element_type=f32) + b2_ref[...])   # (tb, 32)
    # action branch: fc3 -> tanh
    x3 = jnp.tanh(jnp.dot(a, w3_ref[...], preferred_element_type=f32)
                  + b3_ref[...])                      # (tb, 32)

    # torch.cat([state_out, action_out], -1) materialized directly in VMEM.
    c = jnp.concatenate([x2, x3], axis=-1)            # (tb, 64) f32

    # fc4 -> relu
    h = jnp.dot(c.astype(bf16), w4_ref[...], preferred_element_type=f32) + b4_ref[...]
    h = jnp.maximum(h, 0.0)
    # fc5 -> relu
    h = jnp.dot(h.astype(bf16), w5_ref[...], preferred_element_type=f32) + b5_ref[...]
    h = jnp.maximum(h, 0.0)

    # fc6 as w6_row @ h^T -> lane-dense (1, tb) row, no cross-lane reduction.
    q = lax.dot_general(w6_ref[...], h.astype(bf16),
                        dimension_numbers=(((1,), (1,)), ((), ())),
                        preferred_element_type=f32) + b6_ref[...]      # (1, tb)
    out_ref[...] = q[None].astype(out_ref.dtype)      # (1, 1, tb)


def prepare_params(params):
    """One-time packing of PyTorch-layout Linear params into kernel form.

    Hoisted out of the per-forward path: bf16 weight casts, (1, N) bias rows,
    fc6 weight laid out as a (1, 256) bf16 row for the w6 @ h^T output.
    """
    (w1, b1, w2, b2, w3, b3, w4, b4, w5, b5, w6, b6) = params
    f32, bf16 = jnp.float32, jnp.bfloat16
    row = lambda b: jnp.asarray(b, f32).reshape(1, -1)
    return (
        jnp.asarray(w1, bf16), row(b1),
        jnp.asarray(w2, bf16), row(b2),
        jnp.asarray(w3, bf16), row(b3),
        jnp.asarray(w4, bf16), row(b4),
        jnp.asarray(w5, bf16), row(b5),
        jnp.asarray(w6, f32).reshape(1, -1).astype(bf16),   # (1, 256)
        jnp.asarray(b6, f32).reshape(1, 1),
    )


def _pick_batch_tile(batch, block_batch):
    # >= 2 grid steps when the batch allows (so ("parallel",) can split work
    # across v7x's two TensorCores); multiple of 8 sublanes, and of 128 once
    # large enough so the lane-dense output stores are unmasked.
    tb = _round_up(max(1, -(-batch // 2)), 8)
    if tb >= 128:
        tb = _round_up(tb, 128)
    return max(8, min(tb, block_batch))


def critic_forward(state, action, kparams, *, block_batch=512):
    """Critic forward pass as a single gridded Pallas TPU kernel.

    `kparams` must come from `prepare_params` (packed once per weight update).
    """
    (w1, b1, w2, b2, w3, b3, w4, b4, w5, b5, w6r, b6) = kparams
    ns, h1 = w1.shape
    na, h3 = w3.shape
    h2 = w2.shape[1]
    h4 = w4.shape[1]
    h5 = w5.shape[1]
    assert w4.shape[0] == h2 + h3, "fc4 input width must equal fc2_out + fc3_out"

    f32 = jnp.float32
    state = jnp.asarray(state, f32)
    action = jnp.asarray(action, f32)
    batch = state.shape[0]

    tb = _pick_batch_tile(batch, block_batch)
    batch_p = _round_up(batch, tb)
    if batch_p != batch:
        pad = batch_p - batch
        state = jnp.pad(state, ((0, pad), (0, 0)))
        action = jnp.pad(action, ((0, pad), (0, 0)))
    num_tiles = batch_p // tb

    batch_spec = lambda width: pl.BlockSpec((tb, width), lambda i: (i, 0))
    resident = lambda shape: pl.BlockSpec(shape, lambda i: (0, 0))  # VMEM-pinned weights

    in_specs = [
        batch_spec(ns), batch_spec(na),
        resident((ns, h1)), resident((1, h1)),
        resident((h1, h2)), resident((1, h2)),
        resident((na, h3)), resident((1, h3)),
        resident((h2 + h3, h4)), resident((1, h4)),
        resident((h4, h5)), resident((1, h5)),
        resident((1, h5)), resident((1, 1)),
    ]
    # Lane-dense output: one (1, tb) row per grid step.
    out_specs = pl.BlockSpec((1, 1, tb), lambda i: (i, 0, 0))

    flops = 2 * batch_p * (ns * h1 + h1 * h2 + na * h3 + (h2 + h3) * h4 + h4 * h5 + h5)
    transcendentals = batch_p * (h1 + h2 + h3)            # 80 / row
    weight_bytes = 2 * int(w1.size + w2.size + w3.size + w4.size + w5.size + w6r.size)
    bias_bytes = 4 * int(b1.size + b2.size + b3.size + b4.size + b5.size + b6.size)
    io_bytes = 4 * batch_p * (ns + na) + 4 * batch_p

    out = pl.pallas_call(
        _critic_kernel,
        out_shape=jax.ShapeDtypeStruct((num_tiles, 1, tb), f32),
        grid=(num_tiles,),
        in_specs=in_specs,
        out_specs=out_specs,
        compiler_params=pltpu.CompilerParams(
            dimension_semantics=("parallel",)),
        cost_estimate=pl.CostEstimate(
            flops=int(flops),
            transcendentals=int(transcendentals),
            bytes_accessed=int(weight_bytes + bias_bytes + io_bytes)),
    )(state, action, *kparams)

    return out.reshape(-1)[:batch].reshape(batch, 1)


def init_params(key, num_states, num_actions):
    """Deterministic synthetic parameters matching torch.nn.Linear shapes,
    stored as (in_features, out_features)."""
    dims = [
        (num_states, 16),   # fc1
        (16, 32),           # fc2
        (num_actions, 32),  # fc3
        (64, 256),          # fc4  (32 * 2 -> 256)
        (256, 256),         # fc5
        (256, 1),           # fc6
    ]
    params = []
    for (fan_in, fan_out) in dims:
        key, kw, kb = jax.random.split(key, 3)
        bound = 1.0 / jnp.sqrt(fan_in)
        w = jax.random.uniform(kw, (fan_in, fan_out), jnp.float32, -bound, bound)
        b = jax.random.uniform(kb, (fan_out,), jnp.float32, -bound, bound)
        params.extend([w, b])
    return tuple(params)


def _reference_forward_f32(state, action, params):
    (w1, b1, w2, b2, w3, b3, w4, b4, w5, b5, w6, b6) = params
    s = jnp.tanh(state @ w1 + b1)
    s = jnp.tanh(s @ w2 + b2)
    a = jnp.tanh(action @ w3 + b3)
    x = jnp.concatenate([s, a], axis=-1)
    x = jax.nn.relu(x @ w4 + b4)
    x = jax.nn.relu(x @ w5 + b5)
    return x @ w6 + b6


def _reference_forward_bf16(state, action, params):
    """Reference with the same bf16-input / f32-accumulate matmul rounding."""
    (w1, b1, w2, b2, w3, b3, w4, b4, w5, b5, w6, b6) = params
    bf16, f32 = jnp.bfloat16, jnp.float32
    dot = lambda x, w: jnp.dot(x.astype(bf16), w.astype(bf16),
                               preferred_element_type=f32)
    s = jnp.tanh(dot(state, w1) + b1)
    s = jnp.tanh(dot(s, w2) + b2)
    a = jnp.tanh(dot(action, w3) + b3)
    x = jnp.concatenate([s, a], axis=-1)
    x = jax.nn.relu(dot(x, w4) + b4)
    x = jax.nn.relu(dot(x, w5) + b5)
    return dot(x, w6) + b6


if __name__ == "__main__":
    num_states, num_actions = 12, 4

    key = jax.random.PRNGKey(0)
    key, kp = jax.random.split(key)
    params = init_params(kp, num_states, num_actions)
    kparams = prepare_params(params)          # one-time weight packing

    for batch in (8, 200):                    # single-tile and multi-tile/padded paths
        ks, ka = jax.random.split(jax.random.fold_in(key, batch))
        state = jax.random.normal(ks, (batch, num_states), jnp.float32)
        action = jax.random.normal(ka, (batch, num_actions), jnp.float32)

        out = jax.block_until_ready(critic_forward(state, action, kparams))
        assert out.shape == (batch, 1)

        # Tight check against a reference with matching bf16-matmul rounding.
        ref_bf16 = _reference_forward_bf16(state, action, params)
        assert jnp.allclose(out, ref_bf16, atol=1e-3, rtol=1e-3), \
            f"mismatch vs bf16-matched reference (batch={batch})"

        # Loose sanity check against the full-f32 PyTorch-equivalent forward.
        ref_f32 = _reference_forward_f32(state, action, params)
        assert jnp.allclose(out, ref_f32, atol=1e-1, rtol=1e-1), \
            f"mismatch vs f32 reference (batch={batch})"

    print("KERNEL_OK")
</pallas_src>

<mosaic_0001>
module attributes {stable_mosaic.version = 11 : i64} {
  func.func @_critic_kernel(%arg0: i32, %arg1: memref<8x12xf32, #tpu.memory_space<vmem>>, %arg2: memref<8x4xf32, #tpu.memory_space<vmem>>, %arg3: memref<12x16xbf16, #tpu.memory_space<vmem>>, %arg4: memref<1x16xf32, #tpu.memory_space<vmem>>, %arg5: memref<16x32xbf16, #tpu.memory_space<vmem>>, %arg6: memref<1x32xf32, #tpu.memory_space<vmem>>, %arg7: memref<4x32xbf16, #tpu.memory_space<vmem>>, %arg8: memref<1x32xf32, #tpu.memory_space<vmem>>, %arg9: memref<64x256xbf16, #tpu.memory_space<vmem>>, %arg10: memref<1x256xf32, #tpu.memory_space<vmem>>, %arg11: memref<256x256xbf16, #tpu.memory_space<vmem>>, %arg12: memref<1x256xf32, #tpu.memory_space<vmem>>, %arg13: memref<1x256xbf16, #tpu.memory_space<vmem>>, %arg14: memref<1x1xf32, #tpu.memory_space<vmem>>, %arg15: memref<1x1x8xf32, #tpu.memory_space<vmem>>) attributes {dimension_semantics = [#tpu.dimension_semantics<parallel>], iteration_bounds = array<i64: 1>, scalar_prefetch = 0 : i64, scratch_operands = 0 : i64, tpu.core_type = #tpu.core_type<tc>, window_params = [{transform_indices = @transform_0, window_bounds = array<i64: 8, 12>}, {transform_indices = @transform_1, window_bounds = array<i64: 8, 4>}, {pipeline_mode = #tpu.pipeline_mode<synchronous>, transform_indices = @transform_2, window_bounds = array<i64: 12, 16>}, {pipeline_mode = #tpu.pipeline_mode<synchronous>, transform_indices = @transform_3, window_bounds = array<i64: 1, 16>}, {pipeline_mode = #tpu.pipeline_mode<synchronous>, transform_indices = @transform_4, window_bounds = array<i64: 16, 32>}, {pipeline_mode = #tpu.pipeline_mode<synchronous>, transform_indices = @transform_5, window_bounds = array<i64: 1, 32>}, {pipeline_mode = #tpu.pipeline_mode<synchronous>, transform_indices = @transform_6, window_bounds = array<i64: 4, 32>}, {pipeline_mode = #tpu.pipeline_mode<synchronous>, transform_indices = @transform_7, window_bounds = array<i64: 1, 32>}, {pipeline_mode = #tpu.pipeline_mode<synchronous>, transform_indices = @transform_8, window_bounds = array<i64: 64, 256>}, {pipeline_mode = #tpu.pipeline_mode<synchronous>, transform_indices = @transform_9, window_bounds = array<i64: 1, 256>}, {pipeline_mode = #tpu.pipeline_mode<synchronous>, transform_indices = @transform_10, window_bounds = array<i64: 256, 256>}, {pipeline_mode = #tpu.pipeline_mode<synchronous>, transform_indices = @transform_11, window_bounds = array<i64: 1, 256>}, {pipeline_mode = #tpu.pipeline_mode<synchronous>, transform_indices = @transform_12, window_bounds = array<i64: 1, 256>}, {pipeline_mode = #tpu.pipeline_mode<synchronous>, transform_indices = @transform_13, window_bounds = array<i64: 1, 1>}, {transform_indices = @transform_14, window_bounds = array<i64: 1, 1, 8>}]} {
    %c0 = arith.constant 0 : index
    %c0_0 = arith.constant 0 : index
    %0 = vector.load %arg1[%c0, %c0_0] : memref<8x12xf32, #tpu.memory_space<vmem>>, vector<8x12xf32>
    %1 = arith.truncf %0 : vector<8x12xf32> to vector<8x12xbf16>
    %c0_1 = arith.constant 0 : index
    %c0_2 = arith.constant 0 : index
    %2 = vector.load %arg2[%c0_1, %c0_2] : memref<8x4xf32, #tpu.memory_space<vmem>>, vector<8x4xf32>
    %3 = arith.truncf %2 : vector<8x4xf32> to vector<8x4xbf16>
    %c0_3 = arith.constant 0 : index
    %c0_4 = arith.constant 0 : index
    %4 = vector.load %arg3[%c0_3, %c0_4] : memref<12x16xbf16, #tpu.memory_space<vmem>>, vector<12x16xbf16>
    %cst = arith.constant dense<0.000000e+00> : vector<8x16xf32>
    %5 = tpu.matmul %1, %4, %cst {dimension_numbers = #tpu.dot_dimension_numbers<[1], [0], [0], [1], [0, 0, 1, 1], [], []>} : vector<8x12xbf16>, vector<12x16xbf16>, vector<8x16xf32> -> vector<8x16xf32>
    %c0_5 = arith.constant 0 : index
    %c0_6 = arith.constant 0 : index
    %6 = vector.load %arg4[%c0_5, %c0_6] : memref<1x16xf32, #tpu.memory_space<vmem>>, vector<1x16xf32>
    %7 = vector.broadcast %6 : vector<1x16xf32> to vector<8x16xf32>
    %8 = arith.addf %5, %7 : vector<8x16xf32>
    %9 = math.tanh %8 : vector<8x16xf32>
    %10 = arith.truncf %9 : vector<8x16xf32> to vector<8x16xbf16>
    %c0_7 = arith.constant 0 : index
    %c0_8 = arith.constant 0 : index
    %11 = vector.load %arg5[%c0_7, %c0_8] : memref<16x32xbf16, #tpu.memory_space<vmem>>, vector<16x32xbf16>
    %cst_9 = arith.constant dense<0.000000e+00> : vector<8x32xf32>
    %12 = tpu.matmul %10, %11, %cst_9 {dimension_numbers = #tpu.dot_dimension_numbers<[1], [0], [0], [1], [0, 0, 1, 1], [], []>} : vector<8x16xbf16>, vector<16x32xbf16>, vector<8x32xf32> -> vector<8x32xf32>
    %c0_10 = arith.constant 0 : index
    %c0_11 = arith.constant 0 : index
    %13 = vector.load %arg6[%c0_10, %c0_11] : memref<1x32xf32, #tpu.memory_space<vmem>>, vector<1x32xf32>
    %14 = vector.broadcast %13 : vector<1x32xf32> to vector<8x32xf32>
    %15 = arith.addf %12, %14 : vector<8x32xf32>
    %16 = math.tanh %15 : vector<8x32xf32>
    %c0_12 = arith.constant 0 : index
    %c0_13 = arith.constant 0 : index
    %17 = vector.load %arg7[%c0_12, %c0_13] : memref<4x32xbf16, #tpu.memory_space<vmem>>, vector<4x32xbf16>
    %cst_14 = arith.constant dense<0.000000e+00> : vector<8x32xf32>
    %18 = tpu.matmul %3, %17, %cst_14 {dimension_numbers = #tpu.dot_dimension_numbers<[1], [0], [0], [1], [0, 0, 1, 1], [], []>} : vector<8x4xbf16>, vector<4x32xbf16>, vector<8x32xf32> -> vector<8x32xf32>
    %c0_15 = arith.constant 0 : index
    %c0_16 = arith.constant 0 : index
    %19 = vector.load %arg8[%c0_15, %c0_16] : memref<1x32xf32, #tpu.memory_space<vmem>>, vector<1x32xf32>
    %20 = vector.broadcast %19 : vector<1x32xf32> to vector<8x32xf32>
    %21 = arith.addf %18, %20 : vector<8x32xf32>
    %22 = math.tanh %21 : vector<8x32xf32>
    %23 = tpu.concatenate %16, %22 in 1 : vector<8x32xf32>, vector<8x32xf32> -> vector<8x64xf32>
    %24 = arith.truncf %23 : vector<8x64xf32> to vector<8x64xbf16>
    %c0_17 = arith.constant 0 : index
    %c0_18 = arith.constant 0 : index
    %25 = vector.load %arg9[%c0_17, %c0_18] : memref<64x256xbf16, #tpu.memory_space<vmem>>, vector<64x256xbf16>
    %cst_19 = arith.constant dense<0.000000e+00> : vector<8x256xf32>
    %26 = tpu.matmul %24, %25, %cst_19 {dimension_numbers = #tpu.dot_dimension_numbers<[1], [0], [0], [1], [0, 0, 1, 1], [], []>} : vector<8x64xbf16>, vector<64x256xbf16>, vector<8x256xf32> -> vector<8x256xf32>
    %c0_20 = arith.constant 0 : index
    %c0_21 = arith.constant 0 : index
    %27 = vector.load %arg10[%c0_20, %c0_21] : memref<1x256xf32, #tpu.memory_space<vmem>>, vector<1x256xf32>
    %28 = vector.broadcast %27 : vector<1x256xf32> to vector<8x256xf32>
    %29 = arith.addf %26, %28 : vector<8x256xf32>
    %cst_22 = arith.constant 0.000000e+00 : f32
    %30 = vector.broadcast %cst_22 : f32 to vector<8x256xf32>
    %31 = arith.maximumf %29, %30 : vector<8x256xf32>
    %32 = arith.truncf %31 : vector<8x256xf32> to vector<8x256xbf16>
    %c0_23 = arith.constant 0 : index
    %c0_24 = arith.constant 0 : index
    %33 = vector.load %arg11[%c0_23, %c0_24] : memref<256x256xbf16, #tpu.memory_space<vmem>>, vector<256x256xbf16>
    %cst_25 = arith.constant dense<0.000000e+00> : vector<8x256xf32>
    %34 = tpu.matmul %32, %33, %cst_25 {dimension_numbers = #tpu.dot_dimension_numbers<[1], [0], [0], [1], [0, 0, 1, 1], [], []>} : vector<8x256xbf16>, vector<256x256xbf16>, vector<8x256xf32> -> vector<8x256xf32>
    %c0_26 = arith.constant 0 : index
    %c0_27 = arith.constant 0 : index
    %35 = vector.load %arg12[%c0_26, %c0_27] : memref<1x256xf32, #tpu.memory_space<vmem>>, vector<1x256xf32>
    %36 = vector.broadcast %35 : vector<1x256xf32> to vector<8x256xf32>
    %37 = arith.addf %34, %36 : vector<8x256xf32>
    %cst_28 = arith.constant 0.000000e+00 : f32
    %38 = vector.broadcast %cst_28 : f32 to vector<8x256xf32>
    %39 = arith.maximumf %37, %38 : vector<8x256xf32>
    %c0_29 = arith.constant 0 : index
    %c0_30 = arith.constant 0 : index
    %40 = vector.load %arg13[%c0_29, %c0_30] : memref<1x256xbf16, #tpu.memory_space<vmem>>, vector<1x256xbf16>
    %41 = arith.truncf %39 : vector<8x256xf32> to vector<8x256xbf16>
    %cst_31 = arith.constant dense<0.000000e+00> : vector<1x8xf32>
    %42 = tpu.matmul %40, %41, %cst_31 {dimension_numbers = #tpu.dot_dimension_numbers<[1], [1], [0], [0], [0, 0, 1, 0], [], []>} : vector<1x256xbf16>, vector<8x256xbf16>, vector<1x8xf32> -> vector<1x8xf32>
    %c0_32 = arith.constant 0 : index
    %c0_33 = arith.constant 0 : index
    %43 = vector.load %arg14[%c0_32, %c0_33] : memref<1x1xf32, #tpu.memory_space<vmem>>, vector<1x1xf32>
    %44 = vector.broadcast %43 : vector<1x1xf32> to vector<1x8xf32>
    %45 = arith.addf %42, %44 : vector<1x8xf32>
    %46 = vector.shape_cast %45 : vector<1x8xf32> to vector<1x1x8xf32>
    %c0_34 = arith.constant 0 : index
    %c0_35 = arith.constant 0 : index
    %c0_36 = arith.constant 0 : index
    %47 = vector.load %arg15[%c0_34, %c0_35, %c0_36] : memref<1x1x8xf32, #tpu.memory_space<vmem>>, vector<1x1x8xf32>
    tpu.vector_store %arg15[%c0_34, %c0_35, %c0_36], %46 {strides = array<i32>} : memref<1x1x8xf32, #tpu.memory_space<vmem>>, vector<1x1x8xf32>,
    return
  }
  func.func @transform_0(%arg0: i32) -> (i32, i32) {
    %c0_i32 = arith.constant 0 : i32
    %c0_i32_0 = arith.constant 0 : i32
    return %arg0, %c0_i32 : i32, i32
  }
  func.func @transform_1(%arg0: i32) -> (i32, i32) {
    %c0_i32 = arith.constant 0 : i32
    %c0_i32_0 = arith.constant 0 : i32
    return %arg0, %c0_i32 : i32, i32
  }
  func.func @transform_2(%arg0: i32) -> (i32, i32) {
    %c0_i32 = arith.constant 0 : i32
    %c0_i32_0 = arith.constant 0 : i32
    %c0_i32_1 = arith.constant 0 : i32
    return %c0_i32, %c0_i32_0 : i32, i32
  }
  func.func @transform_3(%arg0: i32) -> (i32, i32) {
    %c0_i32 = arith.constant 0 : i32
    %c0_i32_0 = arith.constant 0 : i32
    %c0_i32_1 = arith.constant 0 : i32
    return %c0_i32, %c0_i32_0 : i32, i32
  }
  func.func @transform_4(%arg0: i32) -> (i32, i32) {
    %c0_i32 = arith.constant 0 : i32
    %c0_i32_0 = arith.constant 0 : i32
    %c0_i32_1 = arith.constant 0 : i32
    return %c0_i32, %c0_i32_0 : i32, i32
  }
  func.func @transform_5(%arg0: i32) -> (i32, i32) {
    %c0_i32 = arith.constant 0 : i32
    %c0_i32_0 = arith.constant 0 : i32
    %c0_i32_1 = arith.constant 0 : i32
    return %c0_i32, %c0_i32_0 : i32, i32
  }
  func.func @transform_6(%arg0: i32) -> (i32, i32) {
    %c0_i32 = arith.constant 0 : i32
    %c0_i32_0 = arith.constant 0 : i32
    %c0_i32_1 = arith.constant 0 : i32
    return %c0_i32, %c0_i32_0 : i32, i32
  }
  func.func @transform_7(%arg0: i32) -> (i32, i32) {
    %c0_i32 = arith.constant 0 : i32
    %c0_i32_0 = arith.constant 0 : i32
    %c0_i32_1 = arith.constant 0 : i32
    return %c0_i32, %c0_i32_0 : i32, i32
  }
  func.func @transform_8(%arg0: i32) -> (i32, i32) {
    %c0_i32 = arith.constant 0 : i32
    %c0_i32_0 = arith.constant 0 : i32
    %c0_i32_1 = arith.constant 0 : i32
    return %c0_i32, %c0_i32_0 : i32, i32
  }
  func.func @transform_9(%arg0: i32) -> (i32, i32) {
    %c0_i32 = arith.constant 0 : i32
    %c0_i32_0 = arith.constant 0 : i32
    %c0_i32_1 = arith.constant 0 : i32
    return %c0_i32, %c0_i32_0 : i32, i32
  }
  func.func @transform_10(%arg0: i32) -> (i32, i32) {
    %c0_i32 = arith.constant 0 : i32
    %c0_i32_0 = arith.constant 0 : i32
    %c0_i32_1 = arith.constant 0 : i32
    return %c0_i32, %c0_i32_0 : i32, i32
  }
  func.func @transform_11(%arg0: i32) -> (i32, i32) {
    %c0_i32 = arith.constant 0 : i32
    %c0_i32_0 = arith.constant 0 : i32
    %c0_i32_1 = arith.constant 0 : i32
    return %c0_i32, %c0_i32_0 : i32, i32
  }
  func.func @transform_12(%arg0: i32) -> (i32, i32) {
    %c0_i32 = arith.constant 0 : i32
    %c0_i32_0 = arith.constant 0 : i32
    %c0_i32_1 = arith.constant 0 : i32
    return %c0_i32, %c0_i32_0 : i32, i32
  }
  func.func @transform_13(%arg0: i32) -> (i32, i32) {
    %c0_i32 = arith.constant 0 : i32
    %c0_i32_0 = arith.constant 0 : i32
    %c0_i32_1 = arith.constant 0 : i32
    return %c0_i32, %c0_i32_0 : i32, i32
  }
  func.func @transform_14(%arg0: i32) -> (i32, i32, i32) {
    %c0_i32 = arith.constant 0 : i32
    %c0_i32_0 = arith.constant 0 : i32
    %c0_i32_1 = arith.constant 0 : i32
    return %arg0, %c0_i32, %c0_i32_0 : i32, i32, i32
  }
}

</mosaic_0001>

<llo_original>
// kernel: tpu_custom_call.1
$region0: #{tpu_custom_call.1}
  #allocation0 [shape = 'u32[]', space=smem, size = 0x4, offset = 0x4, fixed_abs, tag = 'smem constant byte address 0x4 - core index']
  #allocation1 [shape = 'u32[144,128]{1,0:T(1,128)}', space=vmem, size = 0x12000, scoped, tag = 'internal scratch']
  #allocation2 [shape = 'f32[1,1]{1,0:T(1,128)S(1)}', space=vmem, size = 0x200, scoped, tag = 'scoped memory for tpu_custom_call.1']
  %s0 = inlined_call_operand.vmem [shape: f32[8,12], index: 0, kind: input, shape index: {}]
  %s1 = inlined_call_operand.vmem [shape: f32[8,4], index: 1, kind: input, shape index: {}]
  %s2 = inlined_call_operand.vmem [shape: bf16[12,16], index: 2, kind: input, shape index: {}]
  %s3 = inlined_call_operand.hbm [shape: f32[1,16], index: 3, kind: input, shape index: {}]
  %s4 = inlined_call_operand.vmem [shape: bf16[16,32], index: 4, kind: input, shape index: {}]
  %s5 = inlined_call_operand.vmem [shape: f32[1,32], index: 5, kind: input, shape index: {}]
  %s6 = inlined_call_operand.vmem [shape: bf16[4,32], index: 6, kind: input, shape index: {}]
  %s7 = inlined_call_operand.vmem [shape: f32[1,32], index: 7, kind: input, shape index: {}]
  %s8 = inlined_call_operand.hbm [shape: bf16[64,256], index: 8, kind: input, shape index: {}]
  %s9 = inlined_call_operand.vmem [shape: f32[1,256], index: 9, kind: input, shape index: {}]
  %s10 = inlined_call_operand.hbm [shape: bf16[256,256], index: 10, kind: input, shape index: {}]
  %s11 = inlined_call_operand.vmem [shape: f32[1,256], index: 11, kind: input, shape index: {}]
  %s12 = inlined_call_operand.vmem [shape: bf16[1,256], index: 12, kind: input, shape index: {}]
  %s13 = inlined_call_operand.<no memory space> [shape: f32[1,1], index: 13, kind: input, shape index: {}]
  %s14 = inlined_call_operand.hbm [shape: f32[1,1,8], index: 14, kind: output, shape index: {}]
  %s15 = sld [smem:[#allocation0]]
  $region78: #{tpu_custom_call.1} parent=0
    _
  %s17 = ssub.s32 1, %s15
  %s18 = scalar_select 0, %s17, %s15
  %v19 = vstv %s13
  %20 = vst [vmem:[#allocation2] sm:$0x1] %v19
  $region1: #{tpu_custom_call.1} parent=0
    #allocation3 [shape = 'u8[512]{0}', space=vmem, size = 0x400, scoped, tag = 'input window, operand 3, single buffered']
    #allocation4 [shape = 's32[1]{0}', space=sflag, size = 0x4, scoped, tag = 'scoped memory for tpu_custom_call.1']
    #allocation5 [shape = 's32[1]{0}', space=sflag, size = 0x4, scoped, tag = 'scoped memory for tpu_custom_call.1']
    #allocation6 [shape = 'u8[32768]{0}', space=vmem, size = 0x8000, scoped, tag = 'input window, operand 8, single buffered']
    #allocation7 [shape = 's32[1]{0}', space=sflag, size = 0x4, scoped, tag = 'scoped memory for tpu_custom_call.1']
    #allocation8 [shape = 'u8[131072]{0}', space=vmem, size = 0x20000, scoped, tag = 'input window, operand 10, single buffered']
    #allocation9 [shape = 'u8[512]{0}', space=vmem, size = 0x400, scoped, tag = 'output window, operand 0, single buffered']
    %21 = vsyncpa [#allocation4], 0
    %22 = vsyncpa [#allocation7], 0
    %23 = vsyncpa [#allocation5], 0
    // Predicated region
    $region2: #{tpu_custom_call.1} parent=1 // pred_check
      _
    $region3: #{tpu_custom_call.1} parent=1 // pred_check_branch
      %25 = sbr.rel (0) target = $region5
    $region4: #{tpu_custom_call.1} parent=1 // pred_region
      _
    $region5: #{tpu_custom_call.1} parent=1 // pred_fallthru
      _
    // Predicated region
    $region6: #{tpu_custom_call.1} parent=1 // pred_check
      _
    $region7: #{tpu_custom_call.1} parent=1 // pred_check_branch
      %27 = sbr.rel (0) target = $region9
    $region8: #{tpu_custom_call.1} parent=1 // pred_region
      _
    $region9: #{tpu_custom_call.1} parent=1 // pred_fallthru
      _
    // Predicated region
    $region10: #{tpu_custom_call.1} parent=1 // pred_check
      _
    $region11: #{tpu_custom_call.1} parent=1 // pred_check_branch
      %29 = sbr.rel (0) target = $region13
    $region12: #{tpu_custom_call.1} parent=1 // pred_region
      _
    $region13: #{tpu_custom_call.1} parent=1 // pred_fallthru
      _
    // Predicated region
    $region14: #{tpu_custom_call.1} parent=1 // pred_check
      _
    $region15: #{tpu_custom_call.1} parent=1 // pred_check_branch
      %31 = sbr.rel (0) target = $region17
    $region16: #{tpu_custom_call.1} parent=1 // pred_region
      %s33 = ssub.s32 16, 16
      %34 = vsyncadd [#allocation4], %s33
      %s36 = sshll.u32 [#allocation3], 4
      %s37 = int_to_ptr.vmem [resolvable:$true] %s36
      %39 = dma.hbm_to_vmem [thread:$0]  %s3, 16, %s37, [#allocation4]
    $region17: #{tpu_custom_call.1} parent=1 // pred_fallthru
      _
    // Predicated region
    $region18: #{tpu_custom_call.1} parent=1 // pred_check
      _
    $region19: #{tpu_custom_call.1} parent=1 // pred_check_branch
      %41 = sbr.rel (0) target = $region21
    $region20: #{tpu_custom_call.1} parent=1 // pred_region
      _
    $region21: #{tpu_custom_call.1} parent=1 // pred_fallthru
      _
    // Predicated region
    $region22: #{tpu_custom_call.1} parent=1 // pred_check
      _
    $region23: #{tpu_custom_call.1} parent=1 // pred_check_branch
      %43 = sbr.rel (0) target = $region25
    $region24: #{tpu_custom_call.1} parent=1 // pred_region
      _
    $region25: #{tpu_custom_call.1} parent=1 // pred_fallthru
      _
    // Predicated region
    $region26: #{tpu_custom_call.1} parent=1 // pred_check
      _
    $region27: #{tpu_custom_call.1} parent=1 // pred_check_branch
      %45 = sbr.rel (0) target = $region29
    $region28: #{tpu_custom_call.1} parent=1 // pred_region
      _
    $region29: #{tpu_custom_call.1} parent=1 // pred_fallthru
      _
    // Predicated region
    $region30: #{tpu_custom_call.1} parent=1 // pred_check
      _
    $region31: #{tpu_custom_call.1} parent=1 // pred_check_branch
      %47 = sbr.rel (0) target = $region33
    $region32: #{tpu_custom_call.1} parent=1 // pred_region
      _
    $region33: #{tpu_custom_call.1} parent=1 // pred_fallthru
      _
    // Predicated region
    $region34: #{tpu_custom_call.1} parent=1 // pred_check
      _
    $region35: #{tpu_custom_call.1} parent=1 // pred_check_branch
      %49 = sbr.rel (0) target = $region37
    $region36: #{tpu_custom_call.1} parent=1 // pred_region
      %s51 = ssub.s32 1024, 1024
      %52 = vsyncadd [#allocation7], %s51
      %s53 = sshll.u32 [#allocation6], 4
      %s54 = int_to_ptr.vmem [resolvable:$true] %s53
      %59 = dma.hbm_to_vmem [thread:$0]  %s8, 1024, %s54, [#allocation7], 128, 128, 8
    $region37: #{tpu_custom_call.1} parent=1 // pred_fallthru
      _
    // Predicated region
    $region38: #{tpu_custom_call.1} parent=1 // pred_check
      _
    $region39: #{tpu_custom_call.1} parent=1 // pred_check_branch
      %61 = sbr.rel (0) target = $region41
    $region40: #{tpu_custom_call.1} parent=1 // pred_region
      _
    $region41: #{tpu_custom_call.1} parent=1 // pred_fallthru
      _
    // Predicated region
    $region42: #{tpu_custom_call.1} parent=1 // pred_check
      _
    $region43: #{tpu_custom_call.1} parent=1 // pred_check_branch
      %63 = sbr.rel (0) target = $region45
    $region44: #{tpu_custom_call.1} parent=1 // pred_region
      %s65 = ssub.s32 4096, 4096
      %66 = vsyncadd [#allocation7], %s65
      %s67 = sshll.u32 [#allocation8], 4
      %s68 = int_to_ptr.vmem [resolvable:$true] %s67
      %73 = dma.hbm_to_vmem [thread:$0]  %s10, 4096, %s68, [#allocation7], 128, 128, 8
    $region45: #{tpu_custom_call.1} parent=1 // pred_fallthru
      _
    // Predicated region
    $region46: #{tpu_custom_call.1} parent=1 // pred_check
      _
    $region47: #{tpu_custom_call.1} parent=1 // pred_check_branch
      %75 = sbr.rel (0) target = $region49
    $region48: #{tpu_custom_call.1} parent=1 // pred_region
      _
    $region49: #{tpu_custom_call.1} parent=1 // pred_fallthru
      _
    // Predicated region
    $region50: #{tpu_custom_call.1} parent=1 // pred_check
      _
    $region51: #{tpu_custom_call.1} parent=1 // pred_check_branch
      %77 = sbr.rel (0) target = $region53
    $region52: #{tpu_custom_call.1} parent=1 // pred_region
      _
    $region53: #{tpu_custom_call.1} parent=1 // pred_fallthru
      _
    // Predicated region
    $region54: #{tpu_custom_call.1} parent=1 // pred_check
      _
    $region55: #{tpu_custom_call.1} parent=1 // pred_check_branch
      %79 = sbr.rel (0) target = $region57
    $region56: #{tpu_custom_call.1} parent=1 // pred_region
      _
    $region57: #{tpu_custom_call.1} parent=1 // pred_fallthru
      _
    // Predicated region
    $region58: #{tpu_custom_call.1} parent=1 // pred_check
      _
    $region59: #{tpu_custom_call.1} parent=1 // pred_check_branch
      %81 = sbr.rel (0) target = $region61
    $region60: #{tpu_custom_call.1} parent=1 // pred_region
      %82 = dma.done [#allocation4], 16
    $region61: #{tpu_custom_call.1} parent=1 // pred_fallthru
      _
    // Predicated region
    $region62: #{tpu_custom_call.1} parent=1 // pred_check
      _
    $region63: #{tpu_custom_call.1} parent=1 // pred_check_branch
      %84 = sbr.rel (0) target = $region65
    $region64: #{tpu_custom_call.1} parent=1 // pred_region
      %85 = dma.done [#allocation7], 1024
    $region65: #{tpu_custom_call.1} parent=1 // pred_fallthru
      _
    // Predicated region
    $region66: #{tpu_custom_call.1} parent=1 // pred_check
      _
    $region67: #{tpu_custom_call.1} parent=1 // pred_check_branch
      %87 = sbr.rel (0) target = $region69
    $region68: #{tpu_custom_call.1} parent=1 // pred_region
      %88 = dma.done [#allocation7], 4096
    $region69: #{tpu_custom_call.1} parent=1 // pred_fallthru
      _
    %v90 = vld [vmem:[%s0] sm:$0xff]
    %v91 = vpack.c.bf16 %v90, %v90
    %v92 = vld [vmem:[%s1] sm:$0xff]
    %v93 = vpack.c.bf16 %v92, %v92
    %v94 = vld [vmem:[%s2] sm:$0xf]
    %v95 = vld [vmem:[%s2 + $0x4] sm:$0x3]
    %v96 = vld [vmem:[#allocation3] sm:$0x1]
    %v98 = vlaneseq
    %v99 = vshrl.u32 %v98, 7
    %v100 = vsub.s32 0, %v99
    %v101 = vrot.slane %v96, %v100
    %v105 = vunpack.c.l.b16 %v94
    %v106 = vunpack.c.l.b16 %v95
    %v107 = vpack.c.b16 %v106, %v105
    %vm108 = vcmask 97280
    %v110 = vsel %vm108, %v91, 0
    %vm112 = vcmask 1045504
    %v114 = vsel %vm112, %v107, 0
    %116 = vmatprep.subr.bf16.mxu0 0
    %117 = vmatpush1.bf16.msra.mxu0 %v114
    %118 = vmatprep.subr.bf16.mxu0 0
    %119 = vmatpush1.bf16.msra.mxu0 0
    %120 = vmatprep.subr.bf16.mxu0 0
    %121 = vmatpush1.bf16.msra.mxu0 0
    %122 = vmatprep.subr.bf16.mxu0 0
    %123 = vmatpush1.bf16.msra.mxu0 0
    %124 = vmatprep.subr.bf16.mxu0 0
    %125 = vmatpush1.bf16.msra.mxu0 0
    %126 = vmatprep.subr.bf16.mxu0 0
    %127 = vmatpush1.bf16.msra.mxu0 0
    %128 = vmatprep.subr.bf16.mxu0 0
    %129 = vmatpush1.bf16.msra.mxu0 0
    %130 = vmatprep.subr.bf16.mxu0 0
    %131 = vmatpush1.bf16.msra.mxu0 0
    %132 = vmatprep.subr.bf16.mxu0 0
    %133 = vmatpush1.bf16.msra.mxu0 0
    %134 = vmatprep.subr.bf16.mxu0 0
    %135 = vmatpush1.bf16.msra.mxu0 0
    %136 = vmatprep.subr.bf16.mxu0 0
    %137 = vmatpush1.bf16.msra.mxu0 0
    %138 = vmatprep.subr.bf16.mxu0 0
    %139 = vmatpush1.bf16.msra.mxu0 0
    %140 = vmatprep.subr.bf16.mxu0 0
    %141 = vmatpush1.bf16.msra.mxu0 0
    %142 = vmatprep.subr.bf16.mxu0 0
    %143 = vmatpush1.bf16.msra.mxu0 0
    %144 = vmatprep.subr.bf16.mxu0 0
    %145 = vmatpush1.bf16.msra.mxu0 0
    %146 = vmatprep.subr.bf16.mxu0 0
    %147 = vmatpush1.bf16.msra.mxu0 0
    %148 = vmatprep.mubr.bf16.mxu0 0
    %149 = vmatmul.mubr.bf16.gmra.mrb[0].mxu0 %v110
    %v150 = vpop.f32.mrb[0].mxu0
    %v151 = vadd.f32 %v101, %v150
    %v152 = vpop.f32.mrb[0].mxu0
    %v153 = vpop.f32.mrb[0].mxu0
    %v154 = vpop.f32.mrb[0].mxu0
    %155 = vdwg.mxu0
    %v156 = vtanh.pop %v151
    %v157 = vpack.c.bf16 %v156, %v156
    %v158 = vld [vmem:[%s4] sm:$0xf]
    %v159 = vld [vmem:[%s4 + $0x4] sm:$0xf]
    %v160 = vld [vmem:[%s5] sm:$0x1]
    %v162 = vlaneseq
    %v163 = vshrl.u32 %v162, 7
    %v164 = vsub.s32 0, %v163
    %v165 = vrot.slane %v160, %v164
    %v169 = vunpack.c.l.b16 %v158
    %v170 = vunpack.c.l.b16 %v159
    %v171 = vpack.c.b16 %v170, %v169
    %vm173 = vcmask 130048
    %v175 = vsel %vm173, %v157, 0
    %177 = vmatprep.subr.bf16.mxu0 0
    %178 = vmatpush1.bf16.msra.mxu0 %v171
    %179 = vmatprep.subr.bf16.mxu0 0
    %180 = vmatpush1.bf16.msra.mxu0 0
    %181 = vmatprep.subr.bf16.mxu0 0
    %182 = vmatpush1.bf16.msra.mxu0 0
    %183 = vmatprep.subr.bf16.mxu0 0
    %184 = vmatpush1.bf16.msra.mxu0 0
    %185 = vmatprep.subr.bf16.mxu0 0
    %186 = vmatpush1.bf16.msra.mxu0 0
    %187 = vmatprep.subr.bf16.mxu0 0
    %188 = vmatpush1.bf16.msra.mxu0 0
    %189 = vmatprep.subr.bf16.mxu0 0
    %190 = vmatpush1.bf16.msra.mxu0 0
    %191 = vmatprep.subr.bf16.mxu0 0
    %192 = vmatpush1.bf16.msra.mxu0 0
    %193 = vmatprep.subr.bf16.mxu0 0
    %194 = vmatpush1.bf16.msra.mxu0 0
    %195 = vmatprep.subr.bf16.mxu0 0
    %196 = vmatpush1.bf16.msra.mxu0 0
    %197 = vmatprep.subr.bf16.mxu0 0
    %198 = vmatpush1.bf16.msra.mxu0 0
    %199 = vmatprep.subr.bf16.mxu0 0
    %200 = vmatpush1.bf16.msra.mxu0 0
    %201 = vmatprep.subr.bf16.mxu0 0
    %202 = vmatpush1.bf16.msra.mxu0 0
    %203 = vmatprep.subr.bf16.mxu0 0
    %204 = vmatpush1.bf16.msra.mxu0 0
    %205 = vmatprep.subr.bf16.mxu0 0
    %206 = vmatpush1.bf16.msra.mxu0 0
    %207 = vmatprep.subr.bf16.mxu0 0
    %208 = vmatpush1.bf16.msra.mxu0 0
    %209 = vmatprep.mubr.bf16.mxu0 0
    %210 = vmatmul.mubr.bf16.gmra.mrb[0].mxu0 %v175
    %v211 = vpop.f32.mrb[0].mxu0
    %v212 = vadd.f32 %v165, %v211
    %v213 = vpop.f32.mrb[0].mxu0
    %v214 = vpop.f32.mrb[0].mxu0
    %v215 = vpop.f32.mrb[0].mxu0
    %216 = vdwg.mxu0
    %v217 = vtanh.pop %v212
    %v218 = vld [vmem:[%s6] sm:$0x3]
    %v219 = vld [vmem:[%s7] sm:$0x1]
    %v221 = vlaneseq
    %v222 = vshrl.u32 %v221, 7
    %v223 = vsub.s32 0, %v222
    %v224 = vrot.slane %v219, %v223
    %vm226 = vcmask 31744
    %v228 = vsel %vm226, %v93, 0
    %vm230 = vcmask 1041408
    %v232 = vsel %vm230, %v218, 0
    %234 = vmatprep.subr.bf16.mxu0 0
    %235 = vmatpush1.bf16.msra.mxu0 %v232
    %236 = vmatprep.subr.bf16.mxu0 0
    %237 = vmatpush1.bf16.msra.mxu0 0
    %238 = vmatprep.subr.bf16.mxu0 0
    %239 = vmatpush1.bf16.msra.mxu0 0
    %240 = vmatprep.subr.bf16.mxu0 0
    %241 = vmatpush1.bf16.msra.mxu0 0
    %242 = vmatprep.subr.bf16.mxu0 0
    %243 = vmatpush1.bf16.msra.mxu0 0
    %244 = vmatprep.subr.bf16.mxu0 0
    %245 = vmatpush1.bf16.msra.mxu0 0
    %246 = vmatprep.subr.bf16.mxu0 0
    %247 = vmatpush1.bf16.msra.mxu0 0
    %248 = vmatprep.subr.bf16.mxu0 0
    %249 = vmatpush1.bf16.msra.mxu0 0
    %250 = vmatprep.subr.bf16.mxu0 0
    %251 = vmatpush1.bf16.msra.mxu0 0
    %252 = vmatprep.subr.bf16.mxu0 0
    %253 = vmatpush1.bf16.msra.mxu0 0
    %254 = vmatprep.subr.bf16.mxu0 0
    %255 = vmatpush1.bf16.msra.mxu0 0
    %256 = vmatprep.subr.bf16.mxu0 0
    %257 = vmatpush1.bf16.msra.mxu0 0
    %258 = vmatprep.subr.bf16.mxu0 0
    %259 = vmatpush1.bf16.msra.mxu0 0
    %260 = vmatprep.subr.bf16.mxu0 0
    %261 = vmatpush1.bf16.msra.mxu0 0
    %262 = vmatprep.subr.bf16.mxu0 0
    %263 = vmatpush1.bf16.msra.mxu0 0
    %264 = vmatprep.subr.bf16.mxu0 0
    %265 = vmatpush1.bf16.msra.mxu0 0
    %266 = vmatprep.mubr.bf16.mxu0 0
    %267 = vmatmul.mubr.bf16.gmra.mrb[0].mxu0 %v228
    %v268 = vpop.f32.mrb[0].mxu0
    %v269 = vadd.f32 %v224, %v268
    %v270 = vpop.f32.mrb[0].mxu0
    %v271 = vpop.f32.mrb[0].mxu0
    %v272 = vpop.f32.mrb[0].mxu0
    %273 = vdwg.mxu0
    %v274 = vtanh.pop %v269
    %276 = vrot.lane.b32.xlu0 %v274, 32
    %v277 = vpop.permute.xlu0 %276
    %vm279 = vcmask 261120
    %v280 = vsel %vm279, %v217, %v277
    %v281 = vpack.c.bf16 %v280, %v280
    %v282 = vld [vmem:[#allocation6] sm:$0xff]
    %v283 = vld [vmem:[#allocation6 + $0x8] sm:$0xff]
    %v284 = vld [vmem:[#allocation6 + $0x10] sm:$0xff]
    %v285 = vld [vmem:[#allocation6 + $0x18] sm:$0xff]
    %v286 = vld [vmem:[#allocation6 + $0x20] sm:$0xff]
    %v287 = vld [vmem:[#allocation6 + $0x28] sm:$0xff]
    %v288 = vld [vmem:[#allocation6 + $0x30] sm:$0xff]
    %v289 = vld [vmem:[#allocation6 + $0x38] sm:$0xff]
    %v290 = vld [vmem:[%s9] sm:$0x3]
    %v292 = vlaneseq
    %v293 = vshrl.u32 %v292, 7
    %v294 = vsub.s32 0, %v293
    %v295 = vrot.slane %v290, %v294
    %v296 = vlaneseq
    %v297 = vshrl.u32 %v296, 7
    %v298 = vsub.s32 1, %v297
    %v299 = vrot.slane %v290, %v298
    %v310 = vunpack.c.l.b16 %v282
    %v311 = vunpack.c.h.b16 %v282
    %v312 = vunpack.c.l.b16 %v283
    %v313 = vunpack.c.h.b16 %v283
    %v314 = vunpack.c.l.b16 %v284
    %v315 = vunpack.c.h.b16 %v284
    %v316 = vunpack.c.l.b16 %v285
    %v317 = vunpack.c.h.b16 %v285
    %v318 = vunpack.c.l.b16 %v286
    %v319 = vunpack.c.h.b16 %v286
    %v320 = vunpack.c.l.b16 %v287
    %v321 = vunpack.c.h.b16 %v287
    %v322 = vunpack.c.l.b16 %v288
    %v323 = vunpack.c.h.b16 %v288
    %v324 = vunpack.c.l.b16 %v289
    %v325 = vunpack.c.h.b16 %v289
    %v326 = vpack.c.b16 %v312, %v310
    %v327 = vpack.c.b16 %v313, %v311
    %v328 = vpack.c.b16 %v316, %v314
    %v329 = vpack.c.b16 %v317, %v315
    %v330 = vpack.c.b16 %v320, %v318
    %v331 = vpack.c.b16 %v321, %v319
    %v332 = vpack.c.b16 %v324, %v322
    %v333 = vpack.c.b16 %v325, %v323
    %vm342 = vcmask 523264
    %v344 = vsel %vm342, %v281, 0
    %346 = vmatprep.subr.bf16.mxu0 %v327
    %347 = vmatpush1.bf16.msra.mxu0 %v326
    %348 = vmatprep.subr.bf16.mxu0 %v329
    %349 = vmatpush1.bf16.msra.mxu0 %v328
    %350 = vmatprep.subr.bf16.mxu0 %v331
    %351 = vmatpush1.bf16.msra.mxu0 %v330
    %352 = vmatprep.subr.bf16.mxu0 %v333
    %353 = vmatpush1.bf16.msra.mxu0 %v332
    %354 = vmatprep.subr.bf16.mxu0 0
    %355 = vmatpush1.bf16.msra.mxu0 0
    %356 = vmatprep.subr.bf16.mxu0 0
    %357 = vmatpush1.bf16.msra.mxu0 0
    %358 = vmatprep.subr.bf16.mxu0 0
    %359 = vmatpush1.bf16.msra.mxu0 0
    %360 = vmatprep.subr.bf16.mxu0 0
    %361 = vmatpush1.bf16.msra.mxu0 0
    %362 = vmatprep.subr.bf16.mxu0 0
    %363 = vmatpush1.bf16.msra.mxu0 0
    %364 = vmatprep.subr.bf16.mxu0 0
    %365 = vmatpush1.bf16.msra.mxu0 0
    %366 = vmatprep.subr.bf16.mxu0 0
    %367 = vmatpush1.bf16.msra.mxu0 0
    %368 = vmatprep.subr.bf16.mxu0 0
    %369 = vmatpush1.bf16.msra.mxu0 0
    %370 = vmatprep.subr.bf16.mxu0 0
    %371 = vmatpush1.bf16.msra.mxu0 0
    %372 = vmatprep.subr.bf16.mxu0 0
    %373 = vmatpush1.bf16.msra.mxu0 0
    %374 = vmatprep.subr.bf16.mxu0 0
    %375 = vmatpush1.bf16.msra.mxu0 0
    %376 = vmatprep.subr.bf16.mxu0 0
    %377 = vmatpush1.bf16.msra.mxu0 0
    %378 = vmatprep.mubr.bf16.mxu0 0
    %379 = vmatmul.mubr.bf16.gmra.mrb[0].mxu0 %v344
    %v380 = vpop.f32.mrb[0].mxu0
    %v381 = vadd.f32 %v295, %v380
    %v382 = vpop.f32.mrb[0].mxu0
    %v383 = vadd.f32 %v299, %v382
    %v384 = vpop.f32.mrb[0].mxu0
    %v385 = vpop.f32.mrb[0].mxu0
    %386 = vdwg.mxu0
    %v387 = vmax.f32 %v381, 0.0
    %v388 = vmax.f32 %v383, 0.0
    %v389 = vpack.c.bf16 %v387, %v387
    %v390 = vpack.c.bf16 %v388, %v388
    %v391 = vld [vmem:[#allocation8] sm:$0xff]
    %v392 = vld [vmem:[#allocation8 + $0x8] sm:$0xff]
    %v393 = vld [vmem:[#allocation8 + $0x10] sm:$0xff]
    %v394 = vld [vmem:[#allocation8 + $0x18] sm:$0xff]
    %v395 = vld [vmem:[#allocation8 + $0x20] sm:$0xff]
    %v396 = vld [vmem:[#allocation8 + $0x28] sm:$0xff]
    %v397 = vld [vmem:[#allocation8 + $0x30] sm:$0xff]
    %v398 = vld [vmem:[#allocation8 + $0x38] sm:$0xff]
    %v399 = vld [vmem:[#allocation8 + $0x40] sm:$0xff]
    %v400 = vld [vmem:[#allocation8 + $0x48] sm:$0xff]
    %v401 = vld [vmem:[#allocation8 + $0x50] sm:$0xff]
    %v402 = vld [vmem:[#allocation8 + $0x58] sm:$0xff]
    %v403 = vld [vmem:[#allocation8 + $0x60] sm:$0xff]
    %v404 = vld [vmem:[#allocation8 + $0x68] sm:$0xff]
    %v405 = vld [vmem:[#allocation8 + $0x70] sm:$0xff]
    %v406 = vld [vmem:[#allocation8 + $0x78] sm:$0xff]
    %v407 = vld [vmem:[#allocation8 + $0x80] sm:$0xff]
    %v408 = vld [vmem:[#allocation8 + $0x88] sm:$0xff]
    %v409 = vld [vmem:[#allocation8 + $0x90] sm:$0xff]
    %v410 = vld [vmem:[#allocation8 + $0x98] sm:$0xff]
    %v411 = vld [vmem:[#allocation8 + $0xa0] sm:$0xff]
    %v412 = vld [vmem:[#allocation8 + $0xa8] sm:$0xff]
    %v413 = vld [vmem:[#allocation8 + $0xb0] sm:$0xff]
    %v414 = vld [vmem:[#allocation8 + $0xb8] sm:$0xff]
    %v415 = vld [vmem:[#allocation8 + $0xc0] sm:$0xff]
    %v416 = vld [vmem:[#allocation8 + $0xc8] sm:$0xff]
    %v417 = vld [vmem:[#allocation8 + $0xd0] sm:$0xff]
    %v418 = vld [vmem:[#allocation8 + $0xd8] sm:$0xff]
    %v419 = vld [vmem:[#allocation8 + $0xe0] sm:$0xff]
    %v420 = vld [vmem:[#allocation8 + $0xe8] sm:$0xff]
    %v421 = vld [vmem:[#allocation8 + $0xf0] sm:$0xff]
    %v422 = vld [vmem:[#allocation8 + $0xf8] sm:$0xff]
    %v423 = vld [vmem:[%s11] sm:$0x3]
    %v425 = vlaneseq
    %v426 = vshrl.u32 %v425, 7
    %v427 = vsub.s32 0, %v426
    %v428 = vrot.slane %v423, %v427
    %v429 = vlaneseq
    %v430 = vshrl.u32 %v429, 7
    %v431 = vsub.s32 1, %v430
    %v432 = vrot.slane %v423, %v431
    %v467 = vunpack.c.l.b16 %v391
    %v468 = vunpack.c.h.b16 %v391
    %v469 = vunpack.c.l.b16 %v392
    %v470 = vunpack.c.h.b16 %v392
    %v471 = vunpack.c.l.b16 %v393
    %v472 = vunpack.c.h.b16 %v393
    %v473 = vunpack.c.l.b16 %v394
    %v474 = vunpack.c.h.b16 %v394
    %v475 = vunpack.c.l.b16 %v395
    %v476 = vunpack.c.h.b16 %v395
    %v477 = vunpack.c.l.b16 %v396
    %v478 = vunpack.c.h.b16 %v396
    %v479 = vunpack.c.l.b16 %v397
    %v480 = vunpack.c.h.b16 %v397
    %v481 = vunpack.c.l.b16 %v398
    %v482 = vunpack.c.h.b16 %v398
    %v483 = vunpack.c.l.b16 %v399
    %v484 = vunpack.c.h.b16 %v399
    %v485 = vunpack.c.l.b16 %v400
    %v486 = vunpack.c.h.b16 %v400
    %v487 = vunpack.c.l.b16 %v401
    %v488 = vunpack.c.h.b16 %v401
    %v489 = vunpack.c.l.b16 %v402
    %v490 = vunpack.c.h.b16 %v402
    %v491 = vunpack.c.l.b16 %v403
    %v492 = vunpack.c.h.b16 %v403
    %v493 = vunpack.c.l.b16 %v404
    %v494 = vunpack.c.h.b16 %v404
    %v495 = vunpack.c.l.b16 %v405
    %v496 = vunpack.c.h.b16 %v405
    %v497 = vunpack.c.l.b16 %v406
    %v498 = vunpack.c.h.b16 %v406
    %v499 = vunpack.c.l.b16 %v407
    %v500 = vunpack.c.h.b16 %v407
    %v501 = vunpack.c.l.b16 %v408
    %v502 = vunpack.c.h.b16 %v408
    %v503 = vunpack.c.l.b16 %v409
    %v504 = vunpack.c.h.b16 %v409
    %v505 = vunpack.c.l.b16 %v410
    %v506 = vunpack.c.h.b16 %v410
    %v507 = vunpack.c.l.b16 %v411
    %v508 = vunpack.c.h.b16 %v411
    %v509 = vunpack.c.l.b16 %v412
    %v510 = vunpack.c.h.b16 %v412
    %v511 = vunpack.c.l.b16 %v413
    %v512 = vunpack.c.h.b16 %v413
    %v513 = vunpack.c.l.b16 %v414
    %v514 = vunpack.c.h.b16 %v414
    %v515 = vunpack.c.l.b16 %v415
    %v516 = vunpack.c.h.b16 %v415
    %v517 = vunpack.c.l.b16 %v416
    %v518 = vunpack.c.h.b16 %v416
    %v519 = vunpack.c.l.b16 %v417
    %v520 = vunpack.c.h.b16 %v417
    %v521 = vunpack.c.l.b16 %v418
    %v522 = vunpack.c.h.b16 %v418
    %v523 = vunpack.c.l.b16 %v419
    %v524 = vunpack.c.h.b16 %v419
    %v525 = vunpack.c.l.b16 %v420
    %v526 = vunpack.c.h.b16 %v420
    %v527 = vunpack.c.l.b16 %v421
    %v528 = vunpack.c.h.b16 %v421
    %v529 = vunpack.c.l.b16 %v422
    %v530 = vunpack.c.h.b16 %v422
    %v531 = vpack.c.b16 %v469, %v467
    %v532 = vpack.c.b16 %v470, %v468
    %v533 = vpack.c.b16 %v473, %v471
    %v534 = vpack.c.b16 %v474, %v472
    %v535 = vpack.c.b16 %v477, %v475
    %v536 = vpack.c.b16 %v478, %v476
    %v537 = vpack.c.b16 %v481, %v479
    %v538 = vpack.c.b16 %v482, %v480
    %v539 = vpack.c.b16 %v485, %v483
    %v540 = vpack.c.b16 %v486, %v484
    %v541 = vpack.c.b16 %v489, %v487
    %v542 = vpack.c.b16 %v490, %v488
    %v543 = vpack.c.b16 %v493, %v491
    %v544 = vpack.c.b16 %v494, %v492
    %v545 = vpack.c.b16 %v497, %v495
    %v546 = vpack.c.b16 %v498, %v496
    %v547 = vpack.c.b16 %v501, %v499
    %v548 = vpack.c.b16 %v502, %v500
    %v549 = vpack.c.b16 %v505, %v503
    %v550 = vpack.c.b16 %v506, %v504
    %v551 = vpack.c.b16 %v509, %v507
    %v552 = vpack.c.b16 %v510, %v508
    %v553 = vpack.c.b16 %v513, %v511
    %v554 = vpack.c.b16 %v514, %v512
    %v555 = vpack.c.b16 %v517, %v515
    %v556 = vpack.c.b16 %v518, %v516
    %v557 = vpack.c.b16 %v521, %v519
    %v558 = vpack.c.b16 %v522, %v520
    %v559 = vpack.c.b16 %v525, %v523
    %v560 = vpack.c.b16 %v526, %v524
    %v561 = vpack.c.b16 %v529, %v527
    %v562 = vpack.c.b16 %v530, %v528
    %595 = vmatprep.subr.bf16.mxu0 %v532
    %596 = vmatpush1.bf16.msra.mxu0 %v531
    %597 = vmatprep.subr.bf16.mxu0 %v534
    %598 = vmatpush1.bf16.msra.mxu0 %v533
    %599 = vmatprep.subr.bf16.mxu0 %v536
    %600 = vmatpush1.bf16.msra.mxu0 %v535
    %601 = vmatprep.subr.bf16.mxu0 %v538
    %602 = vmatpush1.bf16.msra.mxu0 %v537
    %603 = vmatprep.subr.bf16.mxu0 %v540
    %604 = vmatpush1.bf16.msra.mxu0 %v539
    %605 = vmatprep.subr.bf16.mxu0 %v542
    %606 = vmatpush1.bf16.msra.mxu0 %v541
    %607 = vmatprep.subr.bf16.mxu0 %v544
    %608 = vmatpush1.bf16.msra.mxu0 %v543
    %609 = vmatprep.subr.bf16.mxu0 %v546
    %610 = vmatpush1.bf16.msra.mxu0 %v545
    %611 = vmatprep.subr.bf16.mxu0 %v548
    %612 = vmatpush1.bf16.msra.mxu0 %v547
    %613 = vmatprep.subr.bf16.mxu0 %v550
    %614 = vmatpush1.bf16.msra.mxu0 %v549
    %615 = vmatprep.subr.bf16.mxu0 %v552
    %616 = vmatpush1.bf16.msra.mxu0 %v551
    %617 = vmatprep.subr.bf16.mxu0 %v554
    %618 = vmatpush1.bf16.msra.mxu0 %v553
    %619 = vmatprep.subr.bf16.mxu0 %v556
    %620 = vmatpush1.bf16.msra.mxu0 %v555
    %621 = vmatprep.subr.bf16.mxu0 %v558
    %622 = vmatpush1.bf16.msra.mxu0 %v557
    %623 = vmatprep.subr.bf16.mxu0 %v560
    %624 = vmatpush1.bf16.msra.mxu0 %v559
    %625 = vmatprep.subr.bf16.mxu0 %v562
    %626 = vmatpush1.bf16.msra.mxu0 %v561
    %627 = vmatprep.mubr.bf16.mxu0 %v390
    %628 = vmatmul.mubr.bf16.gmra.mrb[0].mxu0 %v389
    %v629 = vpop.f32.mrb[0].mxu0
    %v630 = vadd.f32 %v428, %v629
    %v631 = vpop.f32.mrb[0].mxu0
    %v632 = vadd.f32 %v432, %v631
    %v633 = vpop.f32.mrb[0].mxu0
    %v634 = vpop.f32.mrb[0].mxu0
    %635 = vdwg.mxu0
    %v636 = vmax.f32 %v630, 0.0
    %v637 = vmax.f32 %v632, 0.0
    %v638 = vld [vmem:[%s12] sm:$0x3]
    %v639 = vpack.c.bf16 %v636, %v636
    %v640 = vpack.c.bf16 %v637, %v637
    %v641 = vld [vmem:[#allocation2] sm:$0x1]
    %643 = vset.pattern.permute.xlu0 0
    %644 = vperm.xlu0 %643, %v641
    %v645 = vpop.permute.xlu0 %644
    %v647 = vlaneseq
    %v648 = vshrl.u32 %v647, 7
    %v649 = vsub.s32 0, %v648
    %v650 = vrot.slane %v645, %v649
    %v653 = vunpack.c.l.s4 1966171168
    %v654 = vunpack.c.0.s8 %v653
    %v655 = vlaneseq
    %v656 = vshrl.u32 %v655, 7
    %v657 = vsub.s32 %v654, %v656
    %v658 = vrot.slane %v638, %v657
    %v659 = vcombine.high %v658, %v658
    %v661 = vunpack.c.l.s4 1966171168
    %v662 = vunpack.c.0.s8 %v661
    %v663 = vlaneseq
    %v664 = vshrl.u32 %v663, 7
    %v665 = vsub.s32 %v662, %v664
    %v666 = vrot.slane %v658, %v665
    %v668 = vunpack.c.l.s4 1966171168
    %v669 = vunpack.c.0.s8 %v668
    %v670 = vlaneseq
    %v671 = vshrl.u32 %v670, 7
    %v672 = vsub.s32 %v669, %v671
    %v673 = vrot.slane %v659, %v672
    %676 = vmatprep.subr.bf16.mxu0 %v640
    %677 = vmatpush1.bf16.xpose.msra.mxu0 %v639
    %678 = vmatprep.subr.bf16.mxu0 0
    %679 = vmatpush1.bf16.xpose.msra.mxu0 0
    %680 = vmatprep.subr.bf16.mxu0 0
    %681 = vmatpush1.bf16.xpose.msra.mxu0 0
    %682 = vmatprep.subr.bf16.mxu0 0
    %683 = vmatpush1.bf16.xpose.msra.mxu0 0
    %684 = vmatprep.subr.bf16.mxu0 0
    %685 = vmatpush1.bf16.xpose.msra.mxu0 0
    %686 = vmatprep.subr.bf16.mxu0 0
    %687 = vmatpush1.bf16.xpose.msra.mxu0 0
    %688 = vmatprep.subr.bf16.mxu0 0
    %689 = vmatpush1.bf16.xpose.msra.mxu0 0
    %690 = vmatprep.subr.bf16.mxu0 0
    %691 = vmatpush1.bf16.xpose.msra.mxu0 0
    %692 = vmatprep.subr.bf16.mxu0 0
    %693 = vmatpush1.bf16.xpose.msra.mxu0 0
    %694 = vmatprep.subr.bf16.mxu0 0
    %695 = vmatpush1.bf16.xpose.msra.mxu0 0
    %696 = vmatprep.subr.bf16.mxu0 0
    %697 = vmatpush1.bf16.xpose.msra.mxu0 0
    %698 = vmatprep.subr.bf16.mxu0 0
    %699 = vmatpush1.bf16.xpose.msra.mxu0 0
    %700 = vmatprep.subr.bf16.mxu0 0
    %701 = vmatpush1.bf16.xpose.msra.mxu0 0
    %702 = vmatprep.subr.bf16.mxu0 0
    %703 = vmatpush1.bf16.xpose.msra.mxu0 0
    %704 = vmatprep.subr.bf16.mxu0 0
    %705 = vmatpush1.bf16.xpose.msra.mxu0 0
    %706 = vmatprep.subr.bf16.mxu0 0
    %707 = vmatpush1.bf16.xpose.msra.mxu0 0
    %708 = vmatprep.mubr.bf16.mxu0 %v673
    %709 = vmatmul.mubr.bf16.gmra.mrb[0].mxu0 %v666
    %v710 = vpop.f32.mrb[0].mxu0
    %v711 = vadd.f32 %v650, %v710
    %v712 = vpop.f32.mrb[0].mxu0
    %v713 = vpop.f32.mrb[0].mxu0
    %v714 = vpop.f32.mrb[0].mxu0
    %715 = vdwg.mxu0
    %vm716 = vcmask 57344
    %717 = vst.msk [vmem:[#allocation9] sm:$0x1] %vm716, %v711
    // Predicated region
    $region70: #{tpu_custom_call.1} parent=1 // pred_check
      _
    $region71: #{tpu_custom_call.1} parent=1 // pred_check_branch
      %719 = sbr.rel (0) target = $region73
    $region72: #{tpu_custom_call.1} parent=1 // pred_region
      %s721 = ssub.s32 16, 16
      %722 = vsyncadd [#allocation5], %s721
      %s724 = sshll.u32 [#allocation9], 4
      %s725 = int_to_ptr.vmem [resolvable:$true] %s724
      %727 = dma.vmem_to_hbm [thread:$0]  %s725, 16, %s14, [#allocation5]
    $region73: #{tpu_custom_call.1} parent=1 // pred_fallthru
      _
    // Predicated region
    $region74: #{tpu_custom_call.1} parent=1 // pred_check
      _
    $region75: #{tpu_custom_call.1} parent=1 // pred_check_branch
      %729 = sbr.rel (0) target = $region77
    $region76: #{tpu_custom_call.1} parent=1 // pred_region
      %730 = dma.done [#allocation5], 16
    $region77: #{tpu_custom_call.1} parent=1 // pred_fallthru
      _
    %731 = vsyncpa [#allocation4], 1
    %732 = vsyncpa [#allocation7], 1
    %733 = vsyncpa [#allocation5], 1

</llo_original>
